<compile_context>
chip_gen: v6e
topology: v6e:2x2x1
jax: 0.10.0
libtpu: 0.0.40
codegen_flags: <defaults>
</compile_context>

<pallas_src>
import functools

import jax
import jax.numpy as jnp
from jax.experimental import pallas as pl
from jax.experimental.pallas import tpu as pltpu

LANE = 128


def _round_up(x, m):
    return ((x + m - 1) // m) * m


def _pad_to(a, shape):
    pads = [(0, t - s) for s, t in zip(a.shape, shape)]
    if any(p[1] for p in pads):
        a = jnp.pad(a, pads)
    return a


def _mlp_kernel(x_ref, w1_ref, b1_ref, w2_ref, b2_ref, w3_ref, b3_ref, o_ref):
    cdt = w1_ref.dtype  # operand dtype fed to the MXU (f32 or bf16)

    # Layer 1: x @ W1 (MXU, f32 accumulate) + b1, ReLU  (epilogue in f32)
    h = jnp.dot(x_ref[...], w1_ref[...], preferred_element_type=jnp.float32)
    h = jnp.maximum(h + b1_ref[...], 0.0)

    # Layer 2
    h = jnp.dot(h.astype(cdt), w2_ref[...], preferred_element_type=jnp.float32)
    h = jnp.maximum(h + b2_ref[...], 0.0)

    # Layer 3
    h = jnp.dot(h.astype(cdt), w3_ref[...], preferred_element_type=jnp.float32)
    h = jnp.maximum(h + b3_ref[...], 0.0)

    o_ref[...] = h.astype(o_ref.dtype)


@functools.partial(jax.jit,
                   static_argnames=("tile_m", "compute_dtype", "out_dtype"))
def mlp_forward(x, params, *, tile_m=2048, compute_dtype=jnp.bfloat16,
                out_dtype=jnp.float32):
    """Fused 3-layer MLP forward pass as a single Pallas kernel.

    x: (B, input_nodes) float32
    params: dict with w1 (in,hid), b1 (hid,), w2 (hid,hid), b2 (hid,),
            w3 (hid,out), b3 (out,)  -- weights stored (in, out).
    tile_m: row-tile size for the batch grid.
    compute_dtype: dtype fed to the MXU (bf16 default); accumulation, bias add
            and ReLU are always f32.
    out_dtype: dtype stored by the kernel (f32 default, bf16 to halve stores).
    """
    B, in_f = x.shape
    hid = params["w1"].shape[1]
    out_f = params["w3"].shape[1]

    # --- lane-dense padded feature widths (hidden / output -> multiple of 128)
    hid_p = _round_up(hid, LANE)
    out_p = _round_up(out_f, LANE)

    csize = jnp.dtype(compute_dtype).itemsize
    osize = jnp.dtype(out_dtype).itemsize
    align = 16 if csize == 2 else 8  # sublane-packed min tile for 16-bit dtypes

    # --- choose row tile & pad batch so the grid is exact --------------------
    tm = _round_up(min(int(tile_m), max(B, align)), align)
    if (_round_up(B, tm) // tm) < 2 and B > align:
        # Ensure >= 2 grid steps so the "parallel" axis shards across both
        # TensorCores on v7x (harmless on 1-TC v5e/v6e).
        tm = _round_up(-(-B // 2), align)
    Bp = _round_up(B, tm)
    grid = (Bp // tm,)

    # --- VMEM budget (query capacity; leave ~15% headroom for compiler scratch)
    try:
        vmem_cap = int(pltpu.get_tpu_info().vmem_capacity_bytes)
    except Exception:
        vmem_cap = 64 * 1024 * 1024  # conservative: v7x physical VMEM
    vmem_ceiling = int(vmem_cap * 0.85)

    w_bytes = (in_f * hid_p + hid_p * hid_p + hid_p * out_p) * csize
    bias_bytes = (2 * hid_p + out_p) * 4
    # Constant index_map => double buffering the weights gains nothing; single
    # buffer them once the footprint is big enough to matter.
    single_buffer_weights = (w_bytes + bias_bytes) > (4 << 20)
    weight_buf = 1 if single_buffer_weights else 2
    resident_bytes = weight_buf * (w_bytes + bias_bytes)
    if resident_bytes > int(0.6 * vmem_ceiling):
        # TODO(synk): add a hidden-dim ("arbitrary") grid axis with an f32
        # accumulator (pl.when init/finalize) instead of fully-resident weights
        # for very large hidden sizes (v7x has only 64 MiB VMEM).
        raise ValueError(
            f"Resident weight set ({resident_bytes / 2**20:.1f} MiB) exceeds "
            f"the VMEM budget ({vmem_ceiling / 2**20:.1f} MiB); "
            "needs K/N weight tiling.")

    vmem_needed = (
        2 * tm * in_f * csize          # x tile, double-buffered
        + 2 * tm * out_p * osize       # out tile, double-buffered
        + resident_bytes               # resident weights + biases
        + 3 * tm * hid_p * 4           # f32 intermediates / spill headroom
    )
    vmem_limit = int(min(max(int(1.5 * vmem_needed), 16 * 1024 * 1024),
                         vmem_ceiling))

    # --- dtype handling & zero padding (exact: ReLU(0+0)=0, sliced off) ------
    x_c = x.astype(compute_dtype)
    if Bp != B:
        x_c = jnp.pad(x_c, ((0, Bp - B), (0, 0)))
    w1 = _pad_to(params["w1"].astype(compute_dtype), (in_f, hid_p))
    w2 = _pad_to(params["w2"].astype(compute_dtype), (hid_p, hid_p))
    w3 = _pad_to(params["w3"].astype(compute_dtype), (hid_p, out_p))
    b1 = _pad_to(params["b1"].reshape(1, -1).astype(jnp.float32), (1, hid_p))
    b2 = _pad_to(params["b2"].reshape(1, -1).astype(jnp.float32), (1, hid_p))
    b3 = _pad_to(params["b3"].reshape(1, -1).astype(jnp.float32), (1, out_p))

    # --- advisory cost estimate (padded problem) ------------------------------
    flops = 2 * Bp * (in_f * hid_p + hid_p * hid_p + hid_p * out_p)
    bytes_accessed = (Bp * in_f * csize + w_bytes + bias_bytes
                      + Bp * out_p * osize)
    cost = pl.CostEstimate(flops=int(flops), transcendentals=0,
                           bytes_accessed=int(bytes_accessed))

    # --- specs ----------------------------------------------------------------
    row_spec = lambda last: pl.BlockSpec((tm, last), lambda i: (i, 0))
    if single_buffer_weights:
        resident = lambda a: pl.BlockSpec(
            a.shape, lambda i: (0, 0),
            pipeline_mode=pl.Buffered(buffer_count=1))
    else:
        resident = lambda a: pl.BlockSpec(a.shape, lambda i: (0, 0))

    y = pl.pallas_call(
        _mlp_kernel,
        out_shape=jax.ShapeDtypeStruct((Bp, out_p), out_dtype),
        grid=grid,
        in_specs=[
            row_spec(in_f),          # x row tile (full native feature width)
            resident(w1), resident(b1),
            resident(w2), resident(b2),
            resident(w3), resident(b3),
        ],
        out_specs=row_spec(out_p),   # lane-dense (128-multiple) output tile
        compiler_params=pltpu.CompilerParams(
            dimension_semantics=("parallel",),
            vmem_limit_bytes=vmem_limit,
        ),
        cost_estimate=cost,
    )(x_c, w1, b1, w2, b2, w3, b3)

    return y[:B, :out_f]


def init_params(key, input_nodes, hidden_nodes, output_nodes):
    """Deterministic init mirroring PyTorch nn.Linear default
    (uniform(-1/sqrt(fan_in), 1/sqrt(fan_in))). Weights stored as (in, out)."""
    def linear(k, fan_in, fan_out):
        kw, kb = jax.random.split(k)
        bound = 1.0 / jnp.sqrt(float(fan_in))
        w = jax.random.uniform(kw, (fan_in, fan_out), jnp.float32, -bound, bound)
        b = jax.random.uniform(kb, (fan_out,), jnp.float32, -bound, bound)
        return w, b

    k1, k2, k3 = jax.random.split(key, 3)
    w1, b1 = linear(k1, input_nodes, hidden_nodes)
    w2, b2 = linear(k2, hidden_nodes, hidden_nodes)
    w3, b3 = linear(k3, hidden_nodes, output_nodes)
    return {"w1": w1, "b1": b1, "w2": w2, "b2": b2, "w3": w3, "b3": b3}


def mlp_reference(x, p):
    h = jnp.maximum(x @ p["w1"] + p["b1"], 0.0)
    h = jnp.maximum(h @ p["w2"] + p["b2"], 0.0)
    h = jnp.maximum(h @ p["w3"] + p["b3"], 0.0)
    return h


if __name__ == "__main__":
    key = jax.random.PRNGKey(0)
    kx, kx2, kp = jax.random.split(key, 3)

    input_nodes, hidden_nodes, output_nodes = 32, 32, 16
    params = init_params(kp, input_nodes, hidden_nodes, output_nodes)

    # --- small batch, single grid step, f32 compute (exact vs reference) -----
    x_small = jax.random.normal(kx, (8, input_nodes), jnp.float32)
    out_small = jax.block_until_ready(
        mlp_forward(x_small, params, compute_dtype=jnp.float32))
    ref_small = mlp_reference(x_small, params)
    assert out_small.shape == (8, output_nodes)
    assert jnp.allclose(out_small, ref_small, atol=1e-5, rtol=1e-5)

    # --- larger batch, default path: bf16 operands, >=2 grid steps, padding ---
    x_big = jax.random.normal(kx2, (200, input_nodes), jnp.float32)
    out_big = jax.block_until_ready(mlp_forward(x_big, params))
    ref_big = mlp_reference(x_big, params)
    assert out_big.shape == (200, output_nodes)
    assert out_big.dtype == jnp.float32
    assert jnp.allclose(out_big, ref_big, atol=5e-2, rtol=5e-2)

    # --- bf16 output-store path (halves vst traffic; v5e benefit) ------------
    out_bf16 = jax.block_until_ready(
        mlp_forward(x_big, params, out_dtype=jnp.bfloat16))
    assert out_bf16.shape == (200, output_nodes)
    assert out_bf16.dtype == jnp.bfloat16
    assert jnp.allclose(out_bf16.astype(jnp.float32), ref_big,
                        atol=1e-1, rtol=1e-1)

    print("KERNEL_OK")
</pallas_src>

<mosaic_0001>
module attributes {stable_mosaic.version = 11 : i64} {
  func.func @_mlp_kernel(%arg0: i32, %arg1: memref<8x32xf32, #tpu.memory_space<vmem>>, %arg2: memref<32x128xf32, #tpu.memory_space<vmem>>, %arg3: memref<1x128xf32, #tpu.memory_space<vmem>>, %arg4: memref<128x128xf32, #tpu.memory_space<vmem>>, %arg5: memref<1x128xf32, #tpu.memory_space<vmem>>, %arg6: memref<128x128xf32, #tpu.memory_space<vmem>>, %arg7: memref<1x128xf32, #tpu.memory_space<vmem>>, %arg8: memref<8x128xf32, #tpu.memory_space<vmem>>) attributes {dimension_semantics = [#tpu.dimension_semantics<parallel>], iteration_bounds = array<i64: 1>, scalar_prefetch = 0 : i64, scratch_operands = 0 : i64, tpu.core_type = #tpu.core_type<tc>, window_params = [{transform_indices = @transform_0, window_bounds = array<i64: 8, 32>}, {pipeline_mode = #tpu.pipeline_mode<synchronous>, transform_indices = @transform_1, window_bounds = array<i64: 32, 128>}, {pipeline_mode = #tpu.pipeline_mode<synchronous>, transform_indices = @transform_2, window_bounds = array<i64: 1, 128>}, {pipeline_mode = #tpu.pipeline_mode<synchronous>, transform_indices = @transform_3, window_bounds = array<i64: 128, 128>}, {pipeline_mode = #tpu.pipeline_mode<synchronous>, transform_indices = @transform_4, window_bounds = array<i64: 1, 128>}, {pipeline_mode = #tpu.pipeline_mode<synchronous>, transform_indices = @transform_5, window_bounds = array<i64: 128, 128>}, {pipeline_mode = #tpu.pipeline_mode<synchronous>, transform_indices = @transform_6, window_bounds = array<i64: 1, 128>}, {transform_indices = @transform_7, window_bounds = array<i64: 8, 128>}]} {
    %c0 = arith.constant 0 : index
    %c0_0 = arith.constant 0 : index
    %0 = vector.load %arg1[%c0, %c0_0] : memref<8x32xf32, #tpu.memory_space<vmem>>, vector<8x32xf32>
    %c0_1 = arith.constant 0 : index
    %c0_2 = arith.constant 0 : index
    %1 = vector.load %arg2[%c0_1, %c0_2] : memref<32x128xf32, #tpu.memory_space<vmem>>, vector<32x128xf32>
    %cst = arith.constant dense<0.000000e+00> : vector<8x128xf32>
    %2 = tpu.matmul %0, %1, %cst {dimension_numbers = #tpu.dot_dimension_numbers<[1], [0], [0], [1], [0, 0, 1, 1], [], []>} : vector<8x32xf32>, vector<32x128xf32>, vector<8x128xf32> -> vector<8x128xf32>
    %c0_3 = arith.constant 0 : index
    %c0_4 = arith.constant 0 : index
    %3 = vector.load %arg3[%c0_3, %c0_4] : memref<1x128xf32, #tpu.memory_space<vmem>>, vector<1x128xf32>
    %4 = vector.broadcast %3 : vector<1x128xf32> to vector<8x128xf32>
    %5 = arith.addf %2, %4 : vector<8x128xf32>
    %cst_5 = arith.constant 0.000000e+00 : f32
    %6 = vector.broadcast %cst_5 : f32 to vector<8x128xf32>
    %7 = arith.maximumf %5, %6 : vector<8x128xf32>
    %c0_6 = arith.constant 0 : index
    %c0_7 = arith.constant 0 : index
    %8 = vector.load %arg4[%c0_6, %c0_7] : memref<128x128xf32, #tpu.memory_space<vmem>>, vector<128x128xf32>
    %cst_8 = arith.constant dense<0.000000e+00> : vector<8x128xf32>
    %9 = tpu.matmul %7, %8, %cst_8 {dimension_numbers = #tpu.dot_dimension_numbers<[1], [0], [0], [1], [0, 0, 1, 1], [], []>} : vector<8x128xf32>, vector<128x128xf32>, vector<8x128xf32> -> vector<8x128xf32>
    %c0_9 = arith.constant 0 : index
    %c0_10 = arith.constant 0 : index
    %10 = vector.load %arg5[%c0_9, %c0_10] : memref<1x128xf32, #tpu.memory_space<vmem>>, vector<1x128xf32>
    %11 = vector.broadcast %10 : vector<1x128xf32> to vector<8x128xf32>
    %12 = arith.addf %9, %11 : vector<8x128xf32>
    %cst_11 = arith.constant 0.000000e+00 : f32
    %13 = vector.broadcast %cst_11 : f32 to vector<8x128xf32>
    %14 = arith.maximumf %12, %13 : vector<8x128xf32>
    %c0_12 = arith.constant 0 : index
    %c0_13 = arith.constant 0 : index
    %15 = vector.load %arg6[%c0_12, %c0_13] : memref<128x128xf32, #tpu.memory_space<vmem>>, vector<128x128xf32>
    %cst_14 = arith.constant dense<0.000000e+00> : vector<8x128xf32>
    %16 = tpu.matmul %14, %15, %cst_14 {dimension_numbers = #tpu.dot_dimension_numbers<[1], [0], [0], [1], [0, 0, 1, 1], [], []>} : vector<8x128xf32>, vector<128x128xf32>, vector<8x128xf32> -> vector<8x128xf32>
    %c0_15 = arith.constant 0 : index
    %c0_16 = arith.constant 0 : index
    %17 = vector.load %arg7[%c0_15, %c0_16] : memref<1x128xf32, #tpu.memory_space<vmem>>, vector<1x128xf32>
    %18 = vector.broadcast %17 : vector<1x128xf32> to vector<8x128xf32>
    %19 = arith.addf %16, %18 : vector<8x128xf32>
    %cst_17 = arith.constant 0.000000e+00 : f32
    %20 = vector.broadcast %cst_17 : f32 to vector<8x128xf32>
    %21 = arith.maximumf %19, %20 : vector<8x128xf32>
    %c0_18 = arith.constant 0 : index
    %c0_19 = arith.constant 0 : index
    %22 = vector.load %arg8[%c0_18, %c0_19] : memref<8x128xf32, #tpu.memory_space<vmem>>, vector<8x128xf32>
    tpu.vector_store %arg8[%c0_18, %c0_19], %21 {strides = array<i32>} : memref<8x128xf32, #tpu.memory_space<vmem>>, vector<8x128xf32>,
    return
  }
  func.func @transform_0(%arg0: i32) -> (i32, i32) {
    %c0_i32 = arith.constant 0 : i32
    %c0_i32_0 = arith.constant 0 : i32
    return %arg0, %c0_i32 : i32, i32
  }
  func.func @transform_1(%arg0: i32) -> (i32, i32) {
    %c0_i32 = arith.constant 0 : i32
    %c0_i32_0 = arith.constant 0 : i32
    %c0_i32_1 = arith.constant 0 : i32
    return %c0_i32, %c0_i32_0 : i32, i32
  }
  func.func @transform_2(%arg0: i32) -> (i32, i32) {
    %c0_i32 = arith.constant 0 : i32
    %c0_i32_0 = arith.constant 0 : i32
    %c0_i32_1 = arith.constant 0 : i32
    return %c0_i32, %c0_i32_0 : i32, i32
  }
  func.func @transform_3(%arg0: i32) -> (i32, i32) {
    %c0_i32 = arith.constant 0 : i32
    %c0_i32_0 = arith.constant 0 : i32
    %c0_i32_1 = arith.constant 0 : i32
    return %c0_i32, %c0_i32_0 : i32, i32
  }
  func.func @transform_4(%arg0: i32) -> (i32, i32) {
    %c0_i32 = arith.constant 0 : i32
    %c0_i32_0 = arith.constant 0 : i32
    %c0_i32_1 = arith.constant 0 : i32
    return %c0_i32, %c0_i32_0 : i32, i32
  }
  func.func @transform_5(%arg0: i32) -> (i32, i32) {
    %c0_i32 = arith.constant 0 : i32
    %c0_i32_0 = arith.constant 0 : i32
    %c0_i32_1 = arith.constant 0 : i32
    return %c0_i32, %c0_i32_0 : i32, i32
  }
  func.func @transform_6(%arg0: i32) -> (i32, i32) {
    %c0_i32 = arith.constant 0 : i32
    %c0_i32_0 = arith.constant 0 : i32
    %c0_i32_1 = arith.constant 0 : i32
    return %c0_i32, %c0_i32_0 : i32, i32
  }
  func.func @transform_7(%arg0: i32) -> (i32, i32) {
    %c0_i32 = arith.constant 0 : i32
    %c0_i32_0 = arith.constant 0 : i32
    return %arg0, %c0_i32 : i32, i32
  }
}

</mosaic_0001>

<llo_original>
// kernel: mlp_forward.1
$region0: #{mlp_forward.1}
  #allocation0 [shape = 'u32[]', space=smem, size = 0x4, offset = 0x4, fixed_abs, tag = 'smem constant byte address 0x4 - core index']
  #allocation1 [shape = 'u32[144,128]{1,0:T(1,128)}', space=vmem, size = 0x12000, scoped, tag = 'internal scratch']
  %s0 = inlined_call_operand.vmem [shape: f32[8,32], index: 0, kind: input, shape index: {}]
  %s1 = inlined_call_operand.vmem [shape: f32[32,128], index: 1, kind: input, shape index: {}]
  %s2 = inlined_call_operand.vmem [shape: f32[1,128], index: 2, kind: input, shape index: {}]
  %s3 = inlined_call_operand.vmem [shape: f32[128,128], index: 3, kind: input, shape index: {}]
  %s4 = inlined_call_operand.vmem [shape: f32[1,128], index: 4, kind: input, shape index: {}]
  %s5 = inlined_call_operand.vmem [shape: f32[128,128], index: 5, kind: input, shape index: {}]
  %s6 = inlined_call_operand.vmem [shape: f32[1,128], index: 6, kind: input, shape index: {}]
  %s7 = inlined_call_operand.hbm [shape: f32[8,128], index: 7, kind: output, shape index: {}]
  %s8 = sld [smem:[#allocation0]]
  $region38: #{mlp_forward.1} parent=0
    _
  %s10 = ssub.s32 1, %s8
  %s11 = scalar_select 0, %s10, %s8
  $region1: #{mlp_forward.1} parent=0
    #allocation2 [shape = 'u8[4096]{0}', space=vmem, size = 0x1000, scoped, tag = 'output window, operand 0, single buffered']
    #allocation3 [shape = 's32[1]{0}', space=sflag, size = 0x4, scoped, tag = 'scoped memory for mlp_forward.1']
    %12 = vsyncpa [#allocation3], 0
    // Predicated region
    $region2: #{mlp_forward.1} parent=1 // pred_check
      _
    $region3: #{mlp_forward.1} parent=1 // pred_check_branch
      %14 = sbr.rel (0) target = $region5
    $region4: #{mlp_forward.1} parent=1 // pred_region
      _
    $region5: #{mlp_forward.1} parent=1 // pred_fallthru
      _
    // Predicated region
    $region6: #{mlp_forward.1} parent=1 // pred_check
      _
    $region7: #{mlp_forward.1} parent=1 // pred_check_branch
      %16 = sbr.rel (0) target = $region9
    $region8: #{mlp_forward.1} parent=1 // pred_region
      _
    $region9: #{mlp_forward.1} parent=1 // pred_fallthru
      _
    // Predicated region
    $region10: #{mlp_forward.1} parent=1 // pred_check
      _
    $region11: #{mlp_forward.1} parent=1 // pred_check_branch
      %18 = sbr.rel (0) target = $region13
    $region12: #{mlp_forward.1} parent=1 // pred_region
      _
    $region13: #{mlp_forward.1} parent=1 // pred_fallthru
      _
    // Predicated region
    $region14: #{mlp_forward.1} parent=1 // pred_check
      _
    $region15: #{mlp_forward.1} parent=1 // pred_check_branch
      %20 = sbr.rel (0) target = $region17
    $region16: #{mlp_forward.1} parent=1 // pred_region
      _
    $region17: #{mlp_forward.1} parent=1 // pred_fallthru
      _
    // Predicated region
    $region18: #{mlp_forward.1} parent=1 // pred_check
      _
    $region19: #{mlp_forward.1} parent=1 // pred_check_branch
      %22 = sbr.rel (0) target = $region21
    $region20: #{mlp_forward.1} parent=1 // pred_region
      _
    $region21: #{mlp_forward.1} parent=1 // pred_fallthru
      _
    // Predicated region
    $region22: #{mlp_forward.1} parent=1 // pred_check
      _
    $region23: #{mlp_forward.1} parent=1 // pred_check_branch
      %24 = sbr.rel (0) target = $region25
    $region24: #{mlp_forward.1} parent=1 // pred_region
      _
    $region25: #{mlp_forward.1} parent=1 // pred_fallthru
      _
    // Predicated region
    $region26: #{mlp_forward.1} parent=1 // pred_check
      _
    $region27: #{mlp_forward.1} parent=1 // pred_check_branch
      %26 = sbr.rel (0) target = $region29
    $region28: #{mlp_forward.1} parent=1 // pred_region
      _
    $region29: #{mlp_forward.1} parent=1 // pred_fallthru
      _
    %v27 = vld [vmem:[%s0] sm:$0xff]
    %v28 = vld [vmem:[%s1] sm:$0xff]
    %v29 = vld [vmem:[%s1 + $0x8] sm:$0xff]
    %v30 = vld [vmem:[%s1 + $0x10] sm:$0xff]
    %v31 = vld [vmem:[%s1 + $0x18] sm:$0xff]
    %v32 = vld [vmem:[%s2] sm:$0x1]
    %v34 = vlaneseq
    %v35 = vshrl.u32 %v34, 7
    %v36 = vsub.s32 0, %v35
    %v37 = vrot.slane %v32, %v36
    %vm39 = vcmask 261120
    %v41 = vsel %vm39, %v27, 0
    %43 = vmatprep.subr.mxu0 0.0
    %44 = vmatpush1.msra.mxu0 0.0
    %45 = vmatprep.subr.mxu0 0.0
    %46 = vmatpush1.msra.mxu0 0.0
    %47 = vmatprep.subr.mxu0 0.0
    %48 = vmatpush1.msra.mxu0 0.0
    %49 = vmatprep.subr.mxu0 0.0
    %50 = vmatpush1.msra.mxu0 0.0
    %51 = vmatprep.subr.mxu0 0.0
    %52 = vmatpush1.msra.mxu0 0.0
    %53 = vmatprep.subr.mxu0 0.0
    %54 = vmatpush1.msra.mxu0 0.0
    %55 = vmatprep.subr.mxu0 0.0
    %56 = vmatpush1.msra.mxu0 0.0
    %57 = vmatprep.subr.mxu0 0.0
    %58 = vmatpush1.msra.mxu0 0.0
    %59 = vmatprep.subr.mxu0 0.0
    %60 = vmatpush1.msra.mxu0 0.0
    %61 = vmatprep.subr.mxu0 0.0
    %62 = vmatpush1.msra.mxu0 0.0
    %63 = vmatprep.subr.mxu0 0.0
    %64 = vmatpush1.msra.mxu0 0.0
    %65 = vmatprep.subr.mxu0 0.0
    %66 = vmatpush1.msra.mxu0 0.0
    %67 = vmatprep.subr.mxu0 0.0
    %68 = vmatpush1.msra.mxu0 %v31
    %69 = vmatprep.subr.mxu0 0.0
    %70 = vmatpush1.msra.mxu0 %v30
    %71 = vmatprep.subr.mxu0 0.0
    %72 = vmatpush1.msra.mxu0 %v29
    %73 = vmatprep.subr.mxu0 0.0
    %74 = vmatpush1.msra.mxu0 %v28
    %75 = vmatprep.subr.mxu0 0.0
    %76 = vmatpush2.msra.mxu0 0.0
    %77 = vmatprep.subr.mxu0 0.0
    %78 = vmatpush2.msra.mxu0 0.0
    %79 = vmatprep.subr.mxu0 0.0
    %80 = vmatpush2.msra.mxu0 0.0
    %81 = vmatprep.subr.mxu0 0.0
    %82 = vmatpush2.msra.mxu0 0.0
    %83 = vmatprep.subr.mxu0 0.0
    %84 = vmatpush2.msra.mxu0 0.0
    %85 = vmatprep.subr.mxu0 0.0
    %86 = vmatpush2.msra.mxu0 0.0
    %87 = vmatprep.subr.mxu0 0.0
    %88 = vmatpush2.msra.mxu0 0.0
    %89 = vmatprep.subr.mxu0 0.0
    %90 = vmatpush2.msra.mxu0 0.0
    %91 = vmatprep.subr.mxu0 0.0
    %92 = vmatpush2.msra.mxu0 0.0
    %93 = vmatprep.subr.mxu0 0.0
    %94 = vmatpush2.msra.mxu0 0.0
    %95 = vmatprep.subr.mxu0 0.0
    %96 = vmatpush2.msra.mxu0 0.0
    %97 = vmatprep.subr.mxu0 0.0
    %98 = vmatpush2.msra.mxu0 0.0
    %99 = vmatprep.subr.mxu0 0.0
    %100 = vmatpush2.msra.mxu0 0.0
    %101 = vmatprep.subr.mxu0 0.0
    %102 = vmatpush2.msra.mxu0 0.0
    %103 = vmatprep.subr.mxu0 0.0
    %104 = vmatpush2.msra.mxu0 0.0
    %105 = vmatprep.subr.mxu0 0.0
    %106 = vmatpush2.msra.mxu0 0.0
    %107 = vmatprep.mubr.f32.mxu0 0.0
    %108 = vmatmul.mubr.f32.gmra.mxu0 %v41
    %v109 = vpop.f32.mrf.mxu0
    %v110 = vadd.f32 %v37, %v109
    %v111 = vpop.f32.mrf.mxu0
    %112 = vdwg.mxu0
    %v113 = vmax.f32 %v110, 0.0
    %v114 = vld [vmem:[%s3] sm:$0xff]
    %v115 = vld [vmem:[%s3 + $0x8] sm:$0xff]
    %v116 = vld [vmem:[%s3 + $0x10] sm:$0xff]
    %v117 = vld [vmem:[%s3 + $0x18] sm:$0xff]
    %v118 = vld [vmem:[%s3 + $0x20] sm:$0xff]
    %v119 = vld [vmem:[%s3 + $0x28] sm:$0xff]
    %v120 = vld [vmem:[%s3 + $0x30] sm:$0xff]
    %v121 = vld [vmem:[%s3 + $0x38] sm:$0xff]
    %v122 = vld [vmem:[%s3 + $0x40] sm:$0xff]
    %v123 = vld [vmem:[%s3 + $0x48] sm:$0xff]
    %v124 = vld [vmem:[%s3 + $0x50] sm:$0xff]
    %v125 = vld [vmem:[%s3 + $0x58] sm:$0xff]
    %v126 = vld [vmem:[%s3 + $0x60] sm:$0xff]
    %v127 = vld [vmem:[%s3 + $0x68] sm:$0xff]
    %v128 = vld [vmem:[%s3 + $0x70] sm:$0xff]
    %v129 = vld [vmem:[%s3 + $0x78] sm:$0xff]
    %v130 = vld [vmem:[%s4] sm:$0x1]
    %v132 = vlaneseq
    %v133 = vshrl.u32 %v132, 7
    %v134 = vsub.s32 0, %v133
    %v135 = vrot.slane %v130, %v134
    %137 = vmatprep.subr.mxu0 0.0
    %138 = vmatpush1.msra.mxu0 %v129
    %139 = vmatprep.subr.mxu0 0.0
    %140 = vmatpush1.msra.mxu0 %v128
    %141 = vmatprep.subr.mxu0 0.0
    %142 = vmatpush1.msra.mxu0 %v127
    %143 = vmatprep.subr.mxu0 0.0
    %144 = vmatpush1.msra.mxu0 %v126
    %145 = vmatprep.subr.mxu0 0.0
    %146 = vmatpush1.msra.mxu0 %v125
    %147 = vmatprep.subr.mxu0 0.0
    %148 = vmatpush1.msra.mxu0 %v124
    %149 = vmatprep.subr.mxu0 0.0
    %150 = vmatpush1.msra.mxu0 %v123
    %151 = vmatprep.subr.mxu0 0.0
    %152 = vmatpush1.msra.mxu0 %v122
    %153 = vmatprep.subr.mxu0 0.0
    %154 = vmatpush1.msra.mxu0 %v121
    %155 = vmatprep.subr.mxu0 0.0
    %156 = vmatpush1.msra.mxu0 %v120
    %157 = vmatprep.subr.mxu0 0.0
    %158 = vmatpush1.msra.mxu0 %v119
    %159 = vmatprep.subr.mxu0 0.0
    %160 = vmatpush1.msra.mxu0 %v118
    %161 = vmatprep.subr.mxu0 0.0
    %162 = vmatpush1.msra.mxu0 %v117
    %163 = vmatprep.subr.mxu0 0.0
    %164 = vmatpush1.msra.mxu0 %v116
    %165 = vmatprep.subr.mxu0 0.0
    %166 = vmatpush1.msra.mxu0 %v115
    %167 = vmatprep.subr.mxu0 0.0
    %168 = vmatpush1.msra.mxu0 %v114
    %169 = vmatprep.subr.mxu0 0.0
    %170 = vmatpush2.msra.mxu0 0.0
    %171 = vmatprep.subr.mxu0 0.0
    %172 = vmatpush2.msra.mxu0 0.0
    %173 = vmatprep.subr.mxu0 0.0
    %174 = vmatpush2.msra.mxu0 0.0
    %175 = vmatprep.subr.mxu0 0.0
    %176 = vmatpush2.msra.mxu0 0.0
    %177 = vmatprep.subr.mxu0 0.0
    %178 = vmatpush2.msra.mxu0 0.0
    %179 = vmatprep.subr.mxu0 0.0
    %180 = vmatpush2.msra.mxu0 0.0
    %181 = vmatprep.subr.mxu0 0.0
    %182 = vmatpush2.msra.mxu0 0.0
    %183 = vmatprep.subr.mxu0 0.0
    %184 = vmatpush2.msra.mxu0 0.0
    %185 = vmatprep.subr.mxu0 0.0
    %186 = vmatpush2.msra.mxu0 0.0
    %187 = vmatprep.subr.mxu0 0.0
    %188 = vmatpush2.msra.mxu0 0.0
    %189 = vmatprep.subr.mxu0 0.0
    %190 = vmatpush2.msra.mxu0 0.0
    %191 = vmatprep.subr.mxu0 0.0
    %192 = vmatpush2.msra.mxu0 0.0
    %193 = vmatprep.subr.mxu0 0.0
    %194 = vmatpush2.msra.mxu0 0.0
    %195 = vmatprep.subr.mxu0 0.0
    %196 = vmatpush2.msra.mxu0 0.0
    %197 = vmatprep.subr.mxu0 0.0
    %198 = vmatpush2.msra.mxu0 0.0
    %199 = vmatprep.subr.mxu0 0.0
    %200 = vmatpush2.msra.mxu0 0.0
    %201 = vmatprep.mubr.f32.mxu0 0.0
    %202 = vmatmul.mubr.f32.gmra.mxu0 %v113
    %v203 = vpop.f32.mrf.mxu0
    %v204 = vadd.f32 %v135, %v203
    %v205 = vpop.f32.mrf.mxu0
    %206 = vdwg.mxu0
    %v207 = vmax.f32 %v204, 0.0
    %v208 = vld [vmem:[%s5] sm:$0xff]
    %v209 = vld [vmem:[%s5 + $0x8] sm:$0xff]
    %v210 = vld [vmem:[%s5 + $0x10] sm:$0xff]
    %v211 = vld [vmem:[%s5 + $0x18] sm:$0xff]
    %v212 = vld [vmem:[%s5 + $0x20] sm:$0xff]
    %v213 = vld [vmem:[%s5 + $0x28] sm:$0xff]
    %v214 = vld [vmem:[%s5 + $0x30] sm:$0xff]
    %v215 = vld [vmem:[%s5 + $0x38] sm:$0xff]
    %v216 = vld [vmem:[%s5 + $0x40] sm:$0xff]
    %v217 = vld [vmem:[%s5 + $0x48] sm:$0xff]
    %v218 = vld [vmem:[%s5 + $0x50] sm:$0xff]
    %v219 = vld [vmem:[%s5 + $0x58] sm:$0xff]
    %v220 = vld [vmem:[%s5 + $0x60] sm:$0xff]
    %v221 = vld [vmem:[%s5 + $0x68] sm:$0xff]
    %v222 = vld [vmem:[%s5 + $0x70] sm:$0xff]
    %v223 = vld [vmem:[%s5 + $0x78] sm:$0xff]
    %v224 = vld [vmem:[%s6] sm:$0x1]
    %v226 = vlaneseq
    %v227 = vshrl.u32 %v226, 7
    %v228 = vsub.s32 0, %v227
    %v229 = vrot.slane %v224, %v228
    %231 = vmatprep.subr.mxu0 0.0
    %232 = vmatpush1.msra.mxu0 %v223
    %233 = vmatprep.subr.mxu0 0.0
    %234 = vmatpush1.msra.mxu0 %v222
    %235 = vmatprep.subr.mxu0 0.0
    %236 = vmatpush1.msra.mxu0 %v221
    %237 = vmatprep.subr.mxu0 0.0
    %238 = vmatpush1.msra.mxu0 %v220
    %239 = vmatprep.subr.mxu0 0.0
    %240 = vmatpush1.msra.mxu0 %v219
    %241 = vmatprep.subr.mxu0 0.0
    %242 = vmatpush1.msra.mxu0 %v218
    %243 = vmatprep.subr.mxu0 0.0
    %244 = vmatpush1.msra.mxu0 %v217
    %245 = vmatprep.subr.mxu0 0.0
    %246 = vmatpush1.msra.mxu0 %v216
    %247 = vmatprep.subr.mxu0 0.0
    %248 = vmatpush1.msra.mxu0 %v215
    %249 = vmatprep.subr.mxu0 0.0
    %250 = vmatpush1.msra.mxu0 %v214
    %251 = vmatprep.subr.mxu0 0.0
    %252 = vmatpush1.msra.mxu0 %v213
    %253 = vmatprep.subr.mxu0 0.0
    %254 = vmatpush1.msra.mxu0 %v212
    %255 = vmatprep.subr.mxu0 0.0
    %256 = vmatpush1.msra.mxu0 %v211
    %257 = vmatprep.subr.mxu0 0.0
    %258 = vmatpush1.msra.mxu0 %v210
    %259 = vmatprep.subr.mxu0 0.0
    %260 = vmatpush1.msra.mxu0 %v209
    %261 = vmatprep.subr.mxu0 0.0
    %262 = vmatpush1.msra.mxu0 %v208
    %263 = vmatprep.subr.mxu0 0.0
    %264 = vmatpush2.msra.mxu0 0.0
    %265 = vmatprep.subr.mxu0 0.0
    %266 = vmatpush2.msra.mxu0 0.0
    %267 = vmatprep.subr.mxu0 0.0
    %268 = vmatpush2.msra.mxu0 0.0
    %269 = vmatprep.subr.mxu0 0.0
    %270 = vmatpush2.msra.mxu0 0.0
    %271 = vmatprep.subr.mxu0 0.0
    %272 = vmatpush2.msra.mxu0 0.0
    %273 = vmatprep.subr.mxu0 0.0
    %274 = vmatpush2.msra.mxu0 0.0
    %275 = vmatprep.subr.mxu0 0.0
    %276 = vmatpush2.msra.mxu0 0.0
    %277 = vmatprep.subr.mxu0 0.0
    %278 = vmatpush2.msra.mxu0 0.0
    %279 = vmatprep.subr.mxu0 0.0
    %280 = vmatpush2.msra.mxu0 0.0
    %281 = vmatprep.subr.mxu0 0.0
    %282 = vmatpush2.msra.mxu0 0.0
    %283 = vmatprep.subr.mxu0 0.0
    %284 = vmatpush2.msra.mxu0 0.0
    %285 = vmatprep.subr.mxu0 0.0
    %286 = vmatpush2.msra.mxu0 0.0
    %287 = vmatprep.subr.mxu0 0.0
    %288 = vmatpush2.msra.mxu0 0.0
    %289 = vmatprep.subr.mxu0 0.0
    %290 = vmatpush2.msra.mxu0 0.0
    %291 = vmatprep.subr.mxu0 0.0
    %292 = vmatpush2.msra.mxu0 0.0
    %293 = vmatprep.subr.mxu0 0.0
    %294 = vmatpush2.msra.mxu0 0.0
    %295 = vmatprep.mubr.f32.mxu0 0.0
    %296 = vmatmul.mubr.f32.gmra.mxu0 %v207
    %v297 = vpop.f32.mrf.mxu0
    %v298 = vadd.f32 %v229, %v297
    %v299 = vpop.f32.mrf.mxu0
    %300 = vdwg.mxu0
    %v301 = vmax.f32 %v298, 0.0
    %302 = vst [vmem:[#allocation2] sm:$0xff] %v301
    // Predicated region
    $region30: #{mlp_forward.1} parent=1 // pred_check
      _
    $region31: #{mlp_forward.1} parent=1 // pred_check_branch
      %304 = sbr.rel (0) target = $region33
    $region32: #{mlp_forward.1} parent=1 // pred_region
      %s306 = ssub.s32 128, 128
      %307 = vsyncadd [#allocation3], %s306
      %s309 = sshll.u32 [#allocation2], 4
      %s310 = int_to_ptr.vmem [resolvable:$true] %s309
      %312 = dma.vmem_to_hbm [thread:$0]  %s310, 128, %s7, [#allocation3]
    $region33: #{mlp_forward.1} parent=1 // pred_fallthru
      _
    // Predicated region
    $region34: #{mlp_forward.1} parent=1 // pred_check
      _
    $region35: #{mlp_forward.1} parent=1 // pred_check_branch
      %314 = sbr.rel (0) target = $region37
    $region36: #{mlp_forward.1} parent=1 // pred_region
      %315 = dma.done [#allocation3], 128
    $region37: #{mlp_forward.1} parent=1 // pred_fallthru
      _
    %316 = vsyncpa [#allocation3], 1

</llo_original>
